<compile_context>
chip_gen: v5e
topology: v5e:2x2
jax: 0.10.0
libtpu: 0.0.40
codegen_flags: <defaults>
</compile_context>

<pallas_src>
import jax
import jax.numpy as jnp
from jax.experimental import pallas as pl
from jax.experimental.pallas import tpu as pltpu


def _round_up(x, m):
    return ((x + m - 1) // m) * m


# ---------------------------------------------------------------------------
# Kernel 1: scores = sigmoid((X @ w + b) / 100) via VPU multiply + lane reduce.
# Row-tiled over N ("parallel"); lane-dense (1, TN) output row per tile.
# ---------------------------------------------------------------------------
def _scores_kernel(x_ref, w_ref, b_ref, s_ref):
    # x_ref: [TN, D] VMEM, w_ref: [1, D] VMEM, b_ref: [1, 1] SMEM, s_ref: [1, TN]
    prod = x_ref[...] * w_ref[...]                      # VPU, broadcast row of w
    row = jnp.sum(prod, axis=1)[None, :]                # XLU reduce -> (1, TN)
    s_ref[...] = jax.nn.sigmoid((row + b_ref[0, 0]) / 100.0)


# ---------------------------------------------------------------------------
# Kernel 2: batched gather of R selected rows of A / X via manual DMA, then
#   new_X rows = X[idx] * values  and  new_A rows = A[idx][:, idx] via a
#   strip-wise one-hot MXU matmul over the lane-padded Kl output columns.
# Grid: (num_row_batches,)  -- one (R, *) output tile per step.
# ---------------------------------------------------------------------------
def _pool_kernel(idx_ref, val_ref, idxl_ref, a_hbm, x_hbm,
                 a_out_ref, x_out_ref, a_buf, x_buf, sems):
    i = pl.program_id(0)
    R, N = a_buf.shape            # rows per batch, full A row width
    Kl = a_out_ref.shape[1]       # lane-padded K

    # ---- gather R rows of A and X with concurrent DMAs ----------------------
    @pl.loop(0, R)
    def _(r):
        row = idx_ref[i * R + r]
        pltpu.make_async_copy(a_hbm.at[row], a_buf.at[r], sems.at[0]).start()
        pltpu.make_async_copy(x_hbm.at[row], x_buf.at[r], sems.at[1]).start()

    @pl.loop(0, R)
    def _(r):
        # All copies share one semaphore per operand; wait once per copy size.
        pltpu.make_async_copy(a_hbm.at[0], a_buf.at[0], sems.at[0]).wait()
        pltpu.make_async_copy(x_hbm.at[0], x_buf.at[0], sems.at[1]).wait()

    # ---- new_X rows: scale gathered rows by their scores (done once/batch) --
    x_out_ref[...] = x_buf[...] * val_ref[...]

    # ---- new_A rows: column selection as strip-wise one-hot MXU matmul ------
    # onehot[c, l] = (c == idx[l]); built per strip so the intermediate stays
    # small; cost is amortized over the R-row matmul.
    TS = min(512, N)
    n_strips = (N + TS - 1) // TS
    for s in range(n_strips):
        c0 = s * TS
        ts = min(TS, N - c0)
        cols = c0 + jax.lax.broadcasted_iota(jnp.int32, (ts, Kl), 0)
        onehot = (cols == idxl_ref[...]).astype(jnp.float32)
        partial = jnp.dot(a_buf[:, c0:c0 + ts], onehot,
                          preferred_element_type=jnp.float32)    # [R, Kl]
        if s == 0:
            a_out_ref[...] = partial
        else:
            a_out_ref[...] += partial


def graph_pool(A, X, w, b, k):
    """Pallas implementation of GraphPool.forward.

    A: [N, N] f32 dense adjacency, X: [N, D] f32 node features,
    w: [D, 1] f32, b: [1, 1] f32, k: python float pooling ratio.
    Returns (new_A [K, K], new_X [K, D], idx [K] int32).
    """
    N, D = X.shape
    assert A.shape == (N, N)
    A = A.astype(jnp.float32)
    X = X.astype(jnp.float32)

    # --- kernel 1: projection + sigmoid (row-tiled, VPU path) ----------------
    TN = min(N, 1024)
    n_tiles = pl.cdiv(N, TN)
    w_row = w.reshape(1, D).astype(jnp.float32)
    b_sc = b.reshape(1, 1).astype(jnp.float32)

    scores_tiles = pl.pallas_call(
        _scores_kernel,
        out_shape=jax.ShapeDtypeStruct((n_tiles, TN), jnp.float32),
        grid=(n_tiles,),
        in_specs=[
            pl.BlockSpec((TN, D), lambda i: (i, 0)),            # X row tile
            pl.BlockSpec((1, D), lambda i: (0, 0)),             # w row (resident)
            pl.BlockSpec(memory_space=pltpu.MemorySpace.SMEM),  # b scalar
        ],
        out_specs=pl.BlockSpec((1, TN), lambda i: (i, 0)),      # lane-dense row
        compiler_params=pltpu.CompilerParams(
            dimension_semantics=("parallel",),
            vmem_limit_bytes=32 * 1024 * 1024,
        ),
        cost_estimate=pl.CostEstimate(
            flops=2 * N * D,
            transcendentals=N,
            bytes_accessed=4 * (N * D + D + 1 + n_tiles * TN)),
    )(X, w_row, b_sc)
    scores = scores_tiles.reshape(-1)[:N]                       # -> [N]

    # --- top-k glue -----------------------------------------------------------
    # TODO(synk): top-k / sort has no clean single-Pallas-primitive equivalent.
    k_nodes = max(1, int(round(k * N)))
    values, idx = jax.lax.top_k(scores, k_nodes)
    idx = idx.astype(jnp.int32)

    # --- batching geometry / padding for TPU-friendly layouts ----------------
    R = min(64, _round_up(k_nodes, 8))        # selected rows gathered per step
    Kp = _round_up(k_nodes, R)                # sublane/batch-padded output rows
    Kl = max(128, _round_up(k_nodes, 128))    # lane-dense new_A columns
    num_batches = Kp // R

    idx_pad = jnp.zeros((Kp,), jnp.int32).at[:k_nodes].set(idx)        # valid (<N)
    val_pad = jnp.zeros((Kp, 1), jnp.float32).at[:k_nodes, 0].set(values)
    idx_lane = jnp.zeros((1, Kl), jnp.int32).at[0, :k_nodes].set(idx)

    # --- kernel 2: batched DMA gather + one-hot matmul + scale ---------------
    new_A_pad, new_X_pad = pl.pallas_call(
        _pool_kernel,
        out_shape=(
            jax.ShapeDtypeStruct((Kp, Kl), jnp.float32),
            jax.ShapeDtypeStruct((Kp, D), jnp.float32),
        ),
        grid=(num_batches,),
        in_specs=[
            pl.BlockSpec(memory_space=pltpu.MemorySpace.SMEM),  # idx (row gather)
            pl.BlockSpec((R, 1), lambda i: (i, 0)),             # values per batch
            pl.BlockSpec((1, Kl), lambda i: (0, 0)),            # idx lanes (resident)
            pl.BlockSpec(memory_space=pl.ANY),                  # A stays in HBM
            pl.BlockSpec(memory_space=pl.ANY),                  # X stays in HBM
        ],
        out_specs=[
            pl.BlockSpec((R, Kl), lambda i: (i, 0)),            # new_A row batch
            pl.BlockSpec((R, D), lambda i: (i, 0)),             # new_X row batch
        ],
        scratch_shapes=[
            pltpu.VMEM((R, N), jnp.float32),                    # gathered A rows
            pltpu.VMEM((R, D), jnp.float32),                    # gathered X rows
            pltpu.SemaphoreType.DMA((2,)),                      # A / X copy sems
        ],
        compiler_params=pltpu.CompilerParams(
            dimension_semantics=("parallel",),
            vmem_limit_bytes=32 * 1024 * 1024,
        ),
        cost_estimate=pl.CostEstimate(
            flops=2 * Kp * N * Kl + Kp * D,
            transcendentals=0,
            bytes_accessed=4 * (Kp * N + 2 * Kp * D + Kp * Kl + Kl + 2 * Kp)),
    )(idx_pad, val_pad, idx_lane, A, X)

    new_A = new_A_pad[:k_nodes, :k_nodes]
    new_X = new_X_pad[:k_nodes, :]
    return new_A, new_X, idx


def _reference(A, X, w, b, k):
    """Pure-jnp reference matching the PyTorch forward."""
    scores = jax.nn.sigmoid((X @ w + b)[:, 0] / 100.0)
    N = A.shape[0]
    k_nodes = max(1, int(round(k * N)))
    values, idx = jax.lax.top_k(scores, k_nodes)
    new_X = X[idx, :] * values[:, None]
    new_A = A[idx, :][:, idx]
    return new_A, new_X, idx.astype(jnp.int32)


if __name__ == "__main__":
    key = jax.random.PRNGKey(0)
    k_ratio = 0.5
    N, D = 16, 32                                  # nodes, in_dim

    kA, kX, kW, kB = jax.random.split(key, 4)
    # symmetric-ish adjacency with zero diagonal, float32
    A_raw = jax.random.uniform(kA, (N, N), dtype=jnp.float32)
    A = (A_raw + A_raw.T) * 0.5
    A = A * (1.0 - jnp.eye(N, dtype=jnp.float32))
    X = jax.random.normal(kX, (N, D), dtype=jnp.float32)

    # deterministic nn.Linear(in_dim, 1)-style init: U(-1/sqrt(D), 1/sqrt(D))
    bound = 1.0 / (D ** 0.5)
    w = jax.random.uniform(kW, (D, 1), dtype=jnp.float32, minval=-bound, maxval=bound)
    b = jax.random.uniform(kB, (1, 1), dtype=jnp.float32, minval=-bound, maxval=bound)

    new_A, new_X, idx = graph_pool(A, X, w, b, k_ratio)
    jax.block_until_ready((new_A, new_X, idx))

    ref_A, ref_X, ref_idx = _reference(A, X, w, b, k_ratio)
    assert jnp.array_equal(idx, ref_idx), "idx mismatch"
    assert jnp.allclose(new_A, ref_A, atol=1e-5), "A mismatch"
    assert jnp.allclose(new_X, ref_X, atol=1e-5), "X mismatch"

    print("KERNEL_OK")
</pallas_src>

<mosaic_0001>
module attributes {stable_mosaic.version = 11 : i64} {
  func.func @_scores_kernel(%arg0: i32, %arg1: memref<16x32xf32, #tpu.memory_space<vmem>>, %arg2: memref<1x32xf32, #tpu.memory_space<vmem>>, %arg3: memref<1x1xf32, #tpu.memory_space<smem>>, %arg4: memref<1x16xf32, #tpu.memory_space<vmem>>) attributes {dimension_semantics = [#tpu.dimension_semantics<parallel>], iteration_bounds = array<i64: 1>, scalar_prefetch = 0 : i64, scratch_operands = 0 : i64, tpu.core_type = #tpu.core_type<tc>, window_params = [{transform_indices = @transform_0, window_bounds = array<i64: 16, 32>}, {pipeline_mode = #tpu.pipeline_mode<synchronous>, transform_indices = @transform_1, window_bounds = array<i64: 1, 32>}, {transform_indices = @transform_2, window_bounds = array<i64: 1, 1>}, {transform_indices = @transform_3, window_bounds = array<i64: 1, 16>}]} {
    %c0 = arith.constant 0 : index
    %c0_0 = arith.constant 0 : index
    %0 = vector.load %arg1[%c0, %c0_0] : memref<16x32xf32, #tpu.memory_space<vmem>>, vector<16x32xf32>
    %c0_1 = arith.constant 0 : index
    %c0_2 = arith.constant 0 : index
    %1 = vector.load %arg2[%c0_1, %c0_2] : memref<1x32xf32, #tpu.memory_space<vmem>>, vector<1x32xf32>
    %2 = vector.broadcast %1 : vector<1x32xf32> to vector<16x32xf32>
    %3 = arith.mulf %0, %2 : vector<16x32xf32>
    %cst = arith.constant dense<0.000000e+00> : vector<16xf32>
    %4 = vector.multi_reduction <add>, %3, %cst [1] : vector<16x32xf32> to vector<16xf32>
    %5 = vector.shape_cast %4 : vector<16xf32> to vector<1x16xf32>
    %c0_3 = arith.constant 0 : index
    %c0_4 = arith.constant 0 : index
    %6 = memref.load %arg3[%c0_3, %c0_4] : memref<1x1xf32, #tpu.memory_space<smem>>
    %7 = vector.broadcast %6 : f32 to vector<1x16xf32>
    %8 = arith.addf %5, %7 : vector<1x16xf32>
    %cst_5 = arith.constant 1.000000e+02 : f32
    %9 = vector.broadcast %cst_5 : f32 to vector<1x16xf32>
    %10 = arith.divf %8, %9 : vector<1x16xf32>
    %11 = arith.negf %10 : vector<1x16xf32>
    %12 = math.exp %11 : vector<1x16xf32>
    %cst_6 = arith.constant 1.000000e+00 : f32
    %13 = vector.broadcast %cst_6 : f32 to vector<1x16xf32>
    %14 = arith.addf %13, %12 : vector<1x16xf32>
    %15 = arith.divf %13, %14 : vector<1x16xf32>
    %c0_7 = arith.constant 0 : index
    %c0_8 = arith.constant 0 : index
    %16 = vector.load %arg4[%c0_7, %c0_8] : memref<1x16xf32, #tpu.memory_space<vmem>>, vector<1x16xf32>
    tpu.vector_store %arg4[%c0_7, %c0_8], %15 {strides = array<i32>} : memref<1x16xf32, #tpu.memory_space<vmem>>, vector<1x16xf32>,
    return
  }
  func.func @transform_0(%arg0: i32) -> (i32, i32) {
    %c0_i32 = arith.constant 0 : i32
    %c0_i32_0 = arith.constant 0 : i32
    return %arg0, %c0_i32 : i32, i32
  }
  func.func @transform_1(%arg0: i32) -> (i32, i32) {
    %c0_i32 = arith.constant 0 : i32
    %c0_i32_0 = arith.constant 0 : i32
    %c0_i32_1 = arith.constant 0 : i32
    return %c0_i32, %c0_i32_0 : i32, i32
  }
  func.func @transform_2(%arg0: i32) -> (i32, i32) {
    %c0_i32 = arith.constant 0 : i32
    %c0_i32_0 = arith.constant 0 : i32
    %c0_i32_1 = arith.constant 0 : i32
    return %c0_i32, %c0_i32_0 : i32, i32
  }
  func.func @transform_3(%arg0: i32) -> (i32, i32) {
    %c0_i32 = arith.constant 0 : i32
    %c0_i32_0 = arith.constant 0 : i32
    return %arg0, %c0_i32 : i32, i32
  }
}

</mosaic_0001>

<llo_original>
// kernel: tpu_custom_call.1
$region0: #{tpu_custom_call.1}
  #allocation0 [shape = 'u32[]', space=smem, size = 0x4, offset = 0x4, fixed_abs, tag = 'smem constant byte address 0x4 - core index']
  #allocation1 [shape = 'u32[72,128]{1,0:T(1,128)}', space=vmem, size = 0x9000, scoped, tag = 'internal scratch']
  #allocation2 [shape = 'f32[1,1]{1,0:T(1,128)S(6)}', space=smem, size = 0x200, scoped, tag = 'scoped memory for tpu_custom_call.1']
  %s0 = inlined_call_operand.hbm [shape: f32[16,32], index: 0, kind: input, shape index: {}]
  %s1 = inlined_call_operand.vmem [shape: f32[1,32], index: 1, kind: input, shape index: {}]
  %s2 = inlined_call_operand.<no memory space> [shape: f32[1,1], index: 2, kind: input, shape index: {}]
  %s3 = inlined_call_operand.hbm [shape: f32[1,16], index: 3, kind: output, shape index: {}]
  %s4 = sld [smem:[#allocation0]]
  $region26: #{tpu_custom_call.1} parent=0
    _
  %s6 = ssub.s32 1, %s4
  %s7 = scalar_select 0, %s6, %s4
  %8 = sst [smem:[#allocation2]] %s2
  $region1: #{tpu_custom_call.1} parent=0
    #allocation3 [shape = 'u8[8192]{0}', space=vmem, size = 0x2000, scoped, tag = 'input window, operand 0, single buffered']
    #allocation4 [shape = 's32[1]{0}', space=sflag, size = 0x4, scoped, tag = 'scoped memory for tpu_custom_call.1']
    #allocation5 [shape = 's32[1]{0}', space=sflag, size = 0x4, scoped, tag = 'scoped memory for tpu_custom_call.1']
    #allocation6 [shape = 'u8[512]{0}', space=vmem, size = 0x400, scoped, tag = 'output window, operand 0, single buffered']
    %9 = vsyncpa [#allocation4], 0
    %10 = vsyncpa [#allocation5], 0
    // Predicated region
    $region2: #{tpu_custom_call.1} parent=1 // pred_check
      _
    $region3: #{tpu_custom_call.1} parent=1 // pred_check_branch
      %12 = sbr.rel (0) target = $region5
    $region4: #{tpu_custom_call.1} parent=1 // pred_region
      %14 = vsyncadd [#allocation4], 0
      %s15 = sshll.u32 %s0, 4
      %s16 = int_to_ptr.hbm [resolvable:$true] %s15
      %s17 = sshll.u32 [#allocation3], 4
      %s18 = int_to_ptr.vmem [resolvable:$true] %s17
      %23 = dma.hbm_to_vmem [thread:$0]  %s16, 256, %s18, [#allocation4], 128, 128, 8
    $region5: #{tpu_custom_call.1} parent=1 // pred_fallthru
      _
    // Predicated region
    $region6: #{tpu_custom_call.1} parent=1 // pred_check
      _
    $region7: #{tpu_custom_call.1} parent=1 // pred_check_branch
      %25 = sbr.rel (0) target = $region9
    $region8: #{tpu_custom_call.1} parent=1 // pred_region
      _
    $region9: #{tpu_custom_call.1} parent=1 // pred_fallthru
      _
    // Predicated region
    $region10: #{tpu_custom_call.1} parent=1 // pred_check
      _
    $region11: #{tpu_custom_call.1} parent=1 // pred_check_branch
      %27 = sbr.rel (0) target = $region13
    $region12: #{tpu_custom_call.1} parent=1 // pred_region
      _
    $region13: #{tpu_custom_call.1} parent=1 // pred_fallthru
      _
    // Predicated region
    $region14: #{tpu_custom_call.1} parent=1 // pred_check
      _
    $region15: #{tpu_custom_call.1} parent=1 // pred_check_branch
      %29 = sbr.rel (0) target = $region17
    $region16: #{tpu_custom_call.1} parent=1 // pred_region
      %31 = dma.done [#allocation4], 256
    $region17: #{tpu_custom_call.1} parent=1 // pred_fallthru
      _
    %v32 = vld [vmem:[#allocation3] sm:$0xff]
    %v33 = vld [vmem:[#allocation3 + $0x8] sm:$0xff]
    %v34 = vld [vmem:[%s1] sm:$0x1]
    %v36 = vperm.slane %v34, 0
    %v38 = vmul.f32 %v32, %v36
    %v39 = vmul.f32 %v33, %v36
    %vm40 = vcmask 261120
    %v41 = vsel %vm40, %v38, 0.0
    %42 = vadd.xlane.f32.xlu0 %v41
    %v43 = vpop.xlane.xlu0 %42
    %v44 = vsel %vm40, %v39, 0.0
    %45 = vadd.xlane.f32.xlu0 %v44
    %v46 = vpop.xlane.xlu0 %45
    %s47 = sld [smem:[#allocation2]]
    %v48 = vstv %s47
    %v49 = vadd.f32 %v43, %v48
    %v50 = vadd.f32 %v46, %v48
    %v51 = vrcp.pop 100.0
    %v52 = vmul.f32 100.0, %v51
    %v53 = vsub.f32 1.0, %v52
    %v54 = vmul.f32 %v51, %v53
    %v55 = vadd.f32 %v51, %v54
    %vm56 = vweird.f32 %v51
    %v57 = vsel %vm56, %v51, %v55
    %v58 = vmul.f32 %v49, %v57
    %v59 = vmul.f32 %v50, %v57
    %v60 = vxor.u32 %v58, 2147483648
    %v61 = vxor.u32 %v59, 2147483648
    %v62 = vmul.f32 %v60, 1.442695
    %v63 = vpow.pop %v62
    %v64 = vmul.f32 %v61, 1.442695
    %v65 = vpow.pop %v64
    %v66 = vadd.f32 %v63, 1.0
    %v67 = vadd.f32 %v65, 1.0
    %v68 = vrcp.pop %v66
    %v69 = vmul.f32 %v66, %v68
    %v70 = vsub.f32 1.0, %v69
    %v71 = vmul.f32 %v68, %v70
    %v72 = vadd.f32 %v68, %v71
    %vm73 = vweird.f32 %v66
    %vm74 = vweird.f32 %v68
    %vm75 = vmor %vm73, %vm74
    %v76 = vsel %vm75, %v68, %v72
    %v77 = vand.u32 2147483647, %v66
    %vm78 = vcmp.eq.f32.partialorder %v77, 8.507059e+37
    %v79 = vand.u32 %v66, 2147483648
    %v80 = vor.u32 1.1754944e-38, %v79
    %v81 = vsel %vm78, %v80, %v76
    %v82 = vmul.f32 1.0, %v81
    %v83 = vrcp.pop %v67
    %v84 = vmul.f32 %v67, %v83
    %v85 = vsub.f32 1.0, %v84
    %v86 = vmul.f32 %v83, %v85
    %v87 = vadd.f32 %v83, %v86
    %vm88 = vweird.f32 %v67
    %vm89 = vweird.f32 %v83
    %vm90 = vmor %vm88, %vm89
    %v91 = vsel %vm90, %v83, %v87
    %v92 = vand.u32 2147483647, %v67
    %vm93 = vcmp.eq.f32.partialorder %v92, 8.507059e+37
    %v94 = vand.u32 %v67, 2147483648
    %v95 = vor.u32 1.1754944e-38, %v94
    %v96 = vsel %vm93, %v95, %v91
    %v97 = vmul.f32 1.0, %v96
    %v100 = vlaneseq
    %v101 = vand.u32 %v100, 127
    %v102 = vperm.slane %v82, %v101
    %v103 = vadd.s32 %v101, 4294967288
    %v104 = vperm.slane %v97, %v103
    %vm105 = vcmask 130112
    %v106 = vsel %vm105, %v104, %v102
    %vm108 = vcmask 122880
    %109 = vst.msk [vmem:[#allocation6] sm:$0x1] %vm108, %v106
    // Predicated region
    $region18: #{tpu_custom_call.1} parent=1 // pred_check
      _
    $region19: #{tpu_custom_call.1} parent=1 // pred_check_branch
      %111 = sbr.rel (0) target = $region21
    $region20: #{tpu_custom_call.1} parent=1 // pred_region
      %113 = vsyncadd [#allocation5], 0
      %s115 = sshll.u32 [#allocation6], 4
      %s116 = int_to_ptr.vmem [resolvable:$true] %s115
      %s117 = sshll.u32 %s3, 4
      %s118 = int_to_ptr.hbm [resolvable:$true] %s117
      %120 = dma.vmem_to_hbm [thread:$0]  %s116, 16, %s118, [#allocation5]
    $region21: #{tpu_custom_call.1} parent=1 // pred_fallthru
      _
    // Predicated region
    $region22: #{tpu_custom_call.1} parent=1 // pred_check
      _
    $region23: #{tpu_custom_call.1} parent=1 // pred_check_branch
      %122 = sbr.rel (0) target = $region25
    $region24: #{tpu_custom_call.1} parent=1 // pred_region
      %124 = dma.done [#allocation5], 16
    $region25: #{tpu_custom_call.1} parent=1 // pred_fallthru
      _
    %125 = vsyncpa [#allocation4], 1
    %126 = vsyncpa [#allocation5], 1

</llo_original>
